<compile_context>
chip_gen: v5e
topology: v5e:2x2
jax: 0.10.0
libtpu: 0.0.40
codegen_flags: <defaults>
</compile_context>

<pallas_src>
import jax
import jax.numpy as jnp
from jax.experimental import pallas as pl
from jax.experimental.pallas import tpu as pltpu

LANE = 128
MAX_TILE = 512                      # 512x512 bf16 A tile = 512 KiB (1 MiB dbl-buffered)
XW_RESIDENT_MAX_BYTES = 8 << 20     # keep whole XW VMEM-resident up to 8 MiB (N<=32768)
VMEM_LIMIT_BYTES = 32 << 20         # explicit budget; fits v5e/v6e/v7x


def _pad_to(n, m):
    return ((n + m - 1) // m) * m


# ---------------------------------------------------------------------------
# Kernel 1: feature transform  XW = X @ W  (row-tiled, W resident).
# ---------------------------------------------------------------------------
def _linear_kernel(x_ref, w_ref, o_ref):
    o_ref[...] = jnp.dot(
        x_ref[...], w_ref[...], preferred_element_type=jnp.float32
    ).astype(o_ref.dtype)


def _linear(x_bf16, w_bf16, *, tm):
    n, c_in = x_bf16.shape
    c_out = w_bf16.shape[1]
    return pl.pallas_call(
        _linear_kernel,
        out_shape=jax.ShapeDtypeStruct((n, c_out), jnp.bfloat16),
        grid_spec=pltpu.PrefetchScalarGridSpec(
            num_scalar_prefetch=0,
            grid=(n // tm,),
            in_specs=[
                pl.BlockSpec((tm, c_in), lambda i: (i, 0)),
                pl.BlockSpec((c_in, c_out), lambda i: (0, 0)),
            ],
            out_specs=pl.BlockSpec((tm, c_out), lambda i: (i, 0)),
        ),
        compiler_params=pltpu.CompilerParams(
            dimension_semantics=("parallel",),
            vmem_limit_bytes=VMEM_LIMIT_BYTES,
        ),
    )(x_bf16, w_bf16)


# ---------------------------------------------------------------------------
# Kernel 2: propagation  relu(A_norm @ XW + b) [@ W2], tiled over (rows, reduction).
# f32 VMEM accumulator; bias + ReLU (+ optional fused W2 matmul) on the last k step.
# XW is either whole-array VMEM-resident (sliced with pl.ds) or streamed per k tile.
# ---------------------------------------------------------------------------
def _make_propagate_kernel(xw_resident, tk, fuse_w2):
    def kernel(*refs):
        if fuse_w2:
            a_ref, xw_ref, b_ref, w2_ref, o_ref, acc_ref = refs
        else:
            a_ref, xw_ref, b_ref, o_ref, acc_ref = refs

        k = pl.program_id(1)

        @pl.when(k == 0)
        def _():
            acc_ref[...] = jnp.zeros_like(acc_ref)

        if xw_resident:
            start = pl.multiple_of(k * tk, tk)
            xw_blk = xw_ref[pl.ds(start, tk), :]
        else:
            xw_blk = xw_ref[...]

        acc_ref[...] += jnp.dot(
            a_ref[...], xw_blk, preferred_element_type=jnp.float32
        )

        @pl.when(k == pl.num_programs(1) - 1)
        def _():
            h = jnp.maximum(acc_ref[...] + b_ref[...], 0.0)
            if fuse_w2:
                # Extra (tm,128)x(128,128) matmul rides on MXU slack (mem-bound kernel).
                h = jnp.dot(h.astype(jnp.bfloat16), w2_ref[...],
                            preferred_element_type=jnp.float32)
            o_ref[...] = h.astype(o_ref.dtype)

    return kernel


def _propagate(a_bf16, xw_bf16, b_f32, *, tm, tk, w2_bf16=None,
               out_dtype=jnp.float32):
    n = a_bf16.shape[0]
    c_out = xw_bf16.shape[1]
    fuse_w2 = w2_bf16 is not None
    xw_resident = (xw_bf16.size * 2) <= XW_RESIDENT_MAX_BYTES

    if xw_resident:
        # Whole XW DMA'd once (constant block index), sliced in-kernel.
        xw_spec = pl.BlockSpec((n, c_out), lambda i, k: (0, 0))
    else:
        xw_spec = pl.BlockSpec((tk, c_out), lambda i, k: (k, 0))

    in_specs = [
        pl.BlockSpec((tm, tk), lambda i, k: (i, k)),
        xw_spec,
        pl.BlockSpec((1, c_out), lambda i, k: (0, 0)),
    ]
    args = [a_bf16, xw_bf16, b_f32]
    if fuse_w2:
        in_specs.append(pl.BlockSpec((c_out, c_out), lambda i, k: (0, 0)))
        args.append(w2_bf16)

    kernel = _make_propagate_kernel(xw_resident, tk, fuse_w2)

    return pl.pallas_call(
        kernel,
        out_shape=jax.ShapeDtypeStruct((n, c_out), out_dtype),
        grid_spec=pltpu.PrefetchScalarGridSpec(
            num_scalar_prefetch=0,
            grid=(n // tm, n // tk),
            in_specs=in_specs,
            out_specs=pl.BlockSpec((tm, c_out), lambda i, k: (i, 0)),
            # f32 accumulator kept (tm*128*4 = 256 KiB at tm=512): needed for the
            # fused-W2 epilogue and for bf16 intermediate outputs.
            scratch_shapes=[pltpu.VMEM((tm, c_out), jnp.float32)],
        ),
        compiler_params=pltpu.CompilerParams(
            dimension_semantics=("parallel", "arbitrary"),
            vmem_limit_bytes=VMEM_LIMIT_BYTES,
        ),
    )(*args)


def gcn_forward(a_norm, x, w1, b1, w2, b2):
    """relu(A @ (relu(A @ (X W1) + b1) W2) + b2) with lane-dense padded buffers.

    Note: padded *rows* of the layer-1 intermediate are relu(b1) @ W2 (not zero);
    they never contaminate real rows because A's padded columns are zero, and they
    are sliced off at the end. Padded *columns* stay exactly zero throughout.
    """
    n, c_in = x.shape
    hidden = w1.shape[1]
    c_pad = _pad_to(hidden, LANE)

    if n <= MAX_TILE:
        n_pad = max(_pad_to(n, 8), 8)
        tm = tk = n_pad
    else:
        n_pad = _pad_to(n, MAX_TILE)
        tm = tk = MAX_TILE

    # Cast to bf16 BEFORE padding; jnp.pad avoids materializing n_pad^2 f32 scratch.
    a_p = jnp.pad(a_norm.astype(jnp.bfloat16), ((0, n_pad - n), (0, n_pad - n)))
    x_p = jnp.pad(x.astype(jnp.bfloat16), ((0, n_pad - n), (0, 0)))
    w1_p = jnp.pad(w1.astype(jnp.bfloat16), ((0, 0), (0, c_pad - hidden)))
    b1_p = jnp.pad(b1, (0, c_pad - hidden)).reshape(1, c_pad).astype(jnp.float32)
    w2_p = jnp.pad(w2.astype(jnp.bfloat16),
                   ((0, c_pad - hidden), (0, c_pad - hidden)))
    b2_p = jnp.pad(b2, (0, c_pad - hidden)).reshape(1, c_pad).astype(jnp.float32)

    # Layer 1: XW1 once, then relu(A @ XW1 + b1) @ W2 fused into the epilogue (bf16 out).
    xw1 = _linear(x_p, w1_p, tm=tm)                              # (n_pad, c_pad) bf16
    h1w2 = _propagate(a_p, xw1, b1_p, tm=tm, tk=tk,
                      w2_bf16=w2_p, out_dtype=jnp.bfloat16)      # (n_pad, c_pad) bf16
    # Layer 2: relu(A @ (H1 W2) + b2)  (f32 out).
    out = _propagate(a_p, h1w2, b2_p, tm=tm, tk=tk,
                     out_dtype=jnp.float32)                      # (n_pad, c_pad) f32
    return out[:n, :hidden]


def gcn_reference(a_norm, x, w1, b1, w2, b2):
    """Plain-JAX reference with the same bf16 operand casting as the kernels."""
    def layer(a, xx, w, b):
        xw = jnp.dot(xx.astype(jnp.bfloat16), w.astype(jnp.bfloat16),
                     preferred_element_type=jnp.float32)
        y = jnp.dot(a.astype(jnp.bfloat16), xw.astype(jnp.bfloat16),
                    preferred_element_type=jnp.float32)
        return jnp.maximum(y + b, 0.0)

    h1 = layer(a_norm, x, w1, b1)
    h2 = layer(a_norm, h1, w2, b2)
    return h2


def build_gcn_adjacency(edge_index, num_nodes):
    """Dense A_norm = D^-1/2 (A + I) D^-1/2 from edge_index (2, E)."""
    src, dst = edge_index[0], edge_index[1]
    a = jnp.zeros((num_nodes, num_nodes), jnp.float32)
    a = a.at[dst, src].set(1.0)                                   # message src -> dst
    a = jnp.maximum(a, jnp.eye(num_nodes, dtype=jnp.float32))     # add self loops
    deg = jnp.sum(a, axis=1)
    d_inv_sqrt = jnp.where(deg > 0, 1.0 / jnp.sqrt(deg), 0.0)
    return d_inv_sqrt[:, None] * a * d_inv_sqrt[None, :]


if __name__ == "__main__":
    key = jax.random.PRNGKey(0)
    k_x, k_e, k_w1, k_b1, k_w2, k_b2 = jax.random.split(key, 6)

    num_nodes, num_edges = 16, 40
    inlen, hiddenlen = 8, 32

    # Deterministic node features and (undirected) edge_index.
    x = jax.random.normal(k_x, (num_nodes, inlen), jnp.float32)
    src = jax.random.randint(k_e, (num_edges,), 0, num_nodes)
    dst = jnp.roll(src, 3)
    edge_index = jnp.stack(
        [jnp.concatenate([src, dst]), jnp.concatenate([dst, src])], axis=0
    )
    a_norm = build_gcn_adjacency(edge_index, num_nodes)

    # nn.Linear-style init: U(-1/sqrt(fan_in), 1/sqrt(fan_in)).
    bound1 = 1.0 / jnp.sqrt(jnp.float32(inlen))
    w1 = jax.random.uniform(k_w1, (inlen, hiddenlen), jnp.float32, -bound1, bound1)
    b1 = jax.random.uniform(k_b1, (hiddenlen,), jnp.float32, -bound1, bound1)
    bound2 = 1.0 / jnp.sqrt(jnp.float32(hiddenlen))
    w2 = jax.random.uniform(k_w2, (hiddenlen, hiddenlen), jnp.float32, -bound2, bound2)
    b2 = jax.random.uniform(k_b2, (hiddenlen,), jnp.float32, -bound2, bound2)

    out = gcn_forward(a_norm, x, w1, b1, w2, b2)
    out = jax.block_until_ready(out)

    ref = gcn_reference(a_norm, x, w1, b1, w2, b2)
    assert out.shape == (num_nodes, hiddenlen)
    assert jnp.allclose(out, ref, atol=5e-3, rtol=5e-3), float(
        jnp.max(jnp.abs(out - ref))
    )

    print("KERNEL_OK")
</pallas_src>

<mosaic_0001>
module attributes {stable_mosaic.version = 11 : i64} {
  func.func @_linear_kernel(%arg0: i32, %arg1: memref<16x8xbf16, #tpu.memory_space<vmem>>, %arg2: memref<8x128xbf16, #tpu.memory_space<vmem>>, %arg3: memref<16x128xbf16, #tpu.memory_space<vmem>>) attributes {dimension_semantics = [#tpu.dimension_semantics<parallel>], iteration_bounds = array<i64: 1>, scalar_prefetch = 0 : i64, scratch_operands = 0 : i64, tpu.core_type = #tpu.core_type<tc>, window_params = [{transform_indices = @transform_0, window_bounds = array<i64: 16, 8>}, {pipeline_mode = #tpu.pipeline_mode<synchronous>, transform_indices = @transform_1, window_bounds = array<i64: 8, 128>}, {transform_indices = @transform_2, window_bounds = array<i64: 16, 128>}]} {
    %c0 = arith.constant 0 : index
    %c0_0 = arith.constant 0 : index
    %0 = vector.load %arg1[%c0, %c0_0] : memref<16x8xbf16, #tpu.memory_space<vmem>>, vector<16x8xbf16>
    %c0_1 = arith.constant 0 : index
    %c0_2 = arith.constant 0 : index
    %1 = vector.load %arg2[%c0_1, %c0_2] : memref<8x128xbf16, #tpu.memory_space<vmem>>, vector<8x128xbf16>
    %cst = arith.constant dense<0.000000e+00> : vector<16x128xf32>
    %2 = tpu.matmul %0, %1, %cst {dimension_numbers = #tpu.dot_dimension_numbers<[1], [0], [0], [1], [0, 0, 1, 1], [], []>} : vector<16x8xbf16>, vector<8x128xbf16>, vector<16x128xf32> -> vector<16x128xf32>
    %3 = arith.truncf %2 : vector<16x128xf32> to vector<16x128xbf16>
    %c0_3 = arith.constant 0 : index
    %c0_4 = arith.constant 0 : index
    %4 = vector.load %arg3[%c0_3, %c0_4] : memref<16x128xbf16, #tpu.memory_space<vmem>>, vector<16x128xbf16>
    tpu.vector_store %arg3[%c0_3, %c0_4], %3 {strides = array<i32>} : memref<16x128xbf16, #tpu.memory_space<vmem>>, vector<16x128xbf16>,
    return
  }
  func.func @transform_0(%arg0: i32) -> (i32, i32) {
    %c0_i32 = arith.constant 0 : i32
    %c0_i32_0 = arith.constant 0 : i32
    return %arg0, %c0_i32 : i32, i32
  }
  func.func @transform_1(%arg0: i32) -> (i32, i32) {
    %c0_i32 = arith.constant 0 : i32
    %c0_i32_0 = arith.constant 0 : i32
    %c0_i32_1 = arith.constant 0 : i32
    return %c0_i32, %c0_i32_0 : i32, i32
  }
  func.func @transform_2(%arg0: i32) -> (i32, i32) {
    %c0_i32 = arith.constant 0 : i32
    %c0_i32_0 = arith.constant 0 : i32
    return %arg0, %c0_i32 : i32, i32
  }
}

</mosaic_0001>

<llo_original>
// kernel: tpu_custom_call.1
$region0: #{tpu_custom_call.1}
  #allocation0 [shape = 'u32[]', space=smem, size = 0x4, offset = 0x4, fixed_abs, tag = 'smem constant byte address 0x4 - core index']
  #allocation1 [shape = 'u32[72,128]{1,0:T(1,128)}', space=vmem, size = 0x9000, scoped, tag = 'internal scratch']
  %s0 = inlined_call_operand.vmem [shape: bf16[16,8], index: 0, kind: input, shape index: {}]
  %s1 = inlined_call_operand.vmem [shape: bf16[8,128], index: 1, kind: input, shape index: {}]
  %s2 = inlined_call_operand.hbm [shape: bf16[16,128], index: 2, kind: output, shape index: {}]
  %s3 = sld [smem:[#allocation0]]
  $region18: #{tpu_custom_call.1} parent=0
    _
  %s5 = ssub.s32 1, %s3
  %s6 = scalar_select 0, %s5, %s3
  $region1: #{tpu_custom_call.1} parent=0
    #allocation2 [shape = 'u8[4096]{0}', space=vmem, size = 0x1000, scoped, tag = 'output window, operand 0, single buffered']
    #allocation3 [shape = 's32[1]{0}', space=sflag, size = 0x4, scoped, tag = 'scoped memory for tpu_custom_call.1']
    %7 = vsyncpa [#allocation3], 0
    // Predicated region
    $region2: #{tpu_custom_call.1} parent=1 // pred_check
      _
    $region3: #{tpu_custom_call.1} parent=1 // pred_check_branch
      %9 = sbr.rel (0) target = $region5
    $region4: #{tpu_custom_call.1} parent=1 // pred_region
      _
    $region5: #{tpu_custom_call.1} parent=1 // pred_fallthru
      _
    // Predicated region
    $region6: #{tpu_custom_call.1} parent=1 // pred_check
      _
    $region7: #{tpu_custom_call.1} parent=1 // pred_check_branch
      %11 = sbr.rel (0) target = $region9
    $region8: #{tpu_custom_call.1} parent=1 // pred_region
      _
    $region9: #{tpu_custom_call.1} parent=1 // pred_fallthru
      _
    %v13 = vld [vmem:[%s0] sm:$0xf]
    %v14 = vld [vmem:[%s0 + $0x4] sm:$0xf]
    %v15 = vld [vmem:[%s1] sm:$0xf]
    %v18 = vunpack.c.l.b16 %v13
    %v19 = vunpack.c.l.b16 %v14
    %v20 = vpack.c.b16 %v19, %v18
    %vm21 = vcmask 64512
    %v23 = vsel %vm21, %v20, 0
    %vm25 = vcmask 1043456
    %v27 = vsel %vm25, %v15, 0
    %29 = vmatpush.bf16.msra.mxu0 0
    %30 = vmatpush.bf16.msra.mxu0 0
    %31 = vmatpush.bf16.msra.mxu0 0
    %32 = vmatpush.bf16.msra.mxu0 0
    %33 = vmatpush.bf16.msra.mxu0 0
    %34 = vmatpush.bf16.msra.mxu0 0
    %35 = vmatpush.bf16.msra.mxu0 0
    %36 = vmatpush.bf16.msra.mxu0 %v27
    %37 = vmatmul.bf16.gmra.mxu0 %v23
    %v38 = vpop.f32.mrf.mxu0
    %v39 = vadd.f32 0.0, %v38
    %v40 = vpop.f32.mrf.mxu0
    %v41 = vadd.f32 0.0, %v40
    %42 = vdwg.mxu0
    %v43 = vpack.c.bf16 %v39, %v39
    %v44 = vpack.c.bf16 %v41, %v41
    %45 = vst [vmem:[#allocation2] sm:$0xf] %v43
    %46 = vst [vmem:[#allocation2 + $0x4] sm:$0xf] %v44
    // Predicated region
    $region10: #{tpu_custom_call.1} parent=1 // pred_check
      _
    $region11: #{tpu_custom_call.1} parent=1 // pred_check_branch
      %48 = sbr.rel (0) target = $region13
    $region12: #{tpu_custom_call.1} parent=1 // pred_region
      %50 = vsyncadd [#allocation3], 0
      %s51 = sshll.u32 [#allocation2], 4
      %s52 = int_to_ptr.vmem [resolvable:$true] %s51
      %s53 = sshll.u32 %s2, 4
      %s54 = int_to_ptr.hbm [resolvable:$true] %s53
      %59 = dma.vmem_to_hbm [thread:$0]  %s52, 128, %s54, [#allocation3], 64, 64, 4
    $region13: #{tpu_custom_call.1} parent=1 // pred_fallthru
      _
    // Predicated region
    $region14: #{tpu_custom_call.1} parent=1 // pred_check
      _
    $region15: #{tpu_custom_call.1} parent=1 // pred_check_branch
      %61 = sbr.rel (0) target = $region17
    $region16: #{tpu_custom_call.1} parent=1 // pred_region
      %63 = dma.done [#allocation3], 128
    $region17: #{tpu_custom_call.1} parent=1 // pred_fallthru
      _
    %64 = vsyncpa [#allocation3], 1

</llo_original>
